<compile_context>
chip_gen: v5e
topology: v5e:2x2
jax: 0.10.0
libtpu: 0.0.40
codegen_flags: <defaults>
</compile_context>

<pallas_src>
import math
import functools

import jax
import jax.numpy as jnp
from jax.experimental import pallas as pl
from jax.experimental.pallas import tpu as pltpu


def _wsd_kernel(x_ref, wa_ref, wo_ref, ey_ref, lnw_ref, lnb_ref,
                logits_ref, attn_ref):
    # Per-step tiles.
    x = x_ref[...]                     # [Bt, N, D]  f32   (X == Q, self-attention)
    w_a = wa_ref[...]                  # [D, D]      bf16
    w_o = wo_ref[...]                  # [D, D]      bf16
    e_y = ey_ref[...]                  # [Yp, D]     bf16  (rows >= Y are zero pad)
    ln_w = lnw_ref[...]                # [1, D]      f32
    ln_b = lnb_ref[...]                # [1, D]      f32

    Bt, N, D = x.shape
    Yp = e_y.shape[0]

    x_bf = x.astype(jnp.bfloat16)                      # MXU operand copy
    x2_bf = x_bf.reshape(Bt * N, D)                    # flatten batch for shared matmuls

    # qa = Q @ W_A   (flattened -> Bt*N rows feed the MXU)
    qa = jnp.dot(x2_bf, w_a, preferred_element_type=jnp.float32)      # [Bt*N, D] f32
    qa3 = qa.reshape(Bt, N, D).astype(jnp.bfloat16)

    # scores = (Q W_A) @ X^T  per sentence, contracting last dims (no transpose)
    scores = jnp.einsum('bqd,bkd->bqk', qa3, x_bf,
                        preferred_element_type=jnp.float32)           # [Bt, N, N]

    # Numerically stable softmax over the last axis (f32).
    m = jnp.max(scores, axis=-1, keepdims=True)
    e = jnp.exp(scores - m)
    denom = jnp.sum(e, axis=-1, keepdims=True)
    attn = e * pl.reciprocal(denom, approx=True)                      # [Bt, N, N] f32

    # ctx = A @ X  per sentence.
    ctx = jnp.einsum('bqk,bkd->bqd', attn.astype(jnp.bfloat16), x_bf,
                     preferred_element_type=jnp.float32)              # [Bt, N, D]

    # Q_c = ctx @ W_O   (flattened again).
    q_c = jnp.dot(ctx.reshape(Bt * N, D).astype(jnp.bfloat16), w_o,
                  preferred_element_type=jnp.float32)                 # [Bt*N, D]

    # Residual + LayerNorm over D (eps = 1e-5, elementwise affine), all f32.
    h = q_c + x.reshape(Bt * N, D)
    mean = jnp.mean(h, axis=-1, keepdims=True)
    var = jnp.mean((h - mean) ** 2, axis=-1, keepdims=True)
    h_norm = (h - mean) * jax.lax.rsqrt(var + 1e-5)
    h_out = h_norm * ln_w + ln_b                                      # [Bt*N, D]

    # logits = H @ E_y^T : contract last dims of both operands (no transpose).
    logits = jax.lax.dot_general(
        h_out.astype(jnp.bfloat16), e_y,
        dimension_numbers=(((1,), (1,)), ((), ())),
        preferred_element_type=jnp.float32)                           # [Bt*N, Yp]

    logits_ref[...] = logits.reshape(Bt, N, Yp)
    attn_ref[...] = attn


def _pick_batch_block(B, max_bt=8):
    """Largest divisor of B that is <= max_bt (sentences folded per grid step)."""
    for bt in range(min(B, max_bt), 0, -1):
        if B % bt == 0:
            return bt
    return 1


@jax.jit
def wsd_forward(M_s, E_v, E_y, W_A, W_O, ln_w, ln_b):
    """Forward pass of WSDModel (self-attention mode, eval / no dropout).

    M_s : [B, N] int32 token ids
    Returns (y_logits [B, N, Y], A [B, N, N]), both float32.
    """
    B, N = M_s.shape
    V, D = E_v.shape
    Y, _ = E_y.shape

    # Embedding lookup (glue / gather in XLA). Q == X since v_q is None.
    X = jnp.take(E_v, M_s, axis=0).astype(jnp.float32)                # [B, N, D]

    # Lane-dense logits: pad the sense table to a multiple of 128 rows.
    Yp = ((Y + 127) // 128) * 128
    E_y_pad = jnp.pad(E_y, ((0, Yp - Y), (0, 0))).astype(jnp.bfloat16)

    W_A_bf = W_A.astype(jnp.bfloat16)
    W_O_bf = W_O.astype(jnp.bfloat16)
    ln_w2 = ln_w.reshape(1, D).astype(jnp.float32)
    ln_b2 = ln_b.reshape(1, D).astype(jnp.float32)

    Bt = _pick_batch_block(B)
    grid = (B // Bt,)

    out_shapes = (
        jax.ShapeDtypeStruct((B, N, Yp), jnp.float32),
        jax.ShapeDtypeStruct((B, N, N), jnp.float32),
    )

    logits_pad, attn = pl.pallas_call(
        _wsd_kernel,
        out_shape=out_shapes,
        grid=grid,
        in_specs=[
            pl.BlockSpec((Bt, N, D), lambda b: (b, 0, 0)),   # X (== Q)
            pl.BlockSpec((D, D), lambda b: (0, 0)),          # W_A (bf16)
            pl.BlockSpec((D, D), lambda b: (0, 0)),          # W_O (bf16)
            pl.BlockSpec((Yp, D), lambda b: (0, 0)),         # E_y padded (bf16)
            pl.BlockSpec((1, D), lambda b: (0, 0)),          # layer-norm weight
            pl.BlockSpec((1, D), lambda b: (0, 0)),          # layer-norm bias
        ],
        out_specs=[
            pl.BlockSpec((Bt, N, Yp), lambda b: (b, 0, 0)),  # logits (lane-dense)
            pl.BlockSpec((Bt, N, N), lambda b: (b, 0, 0)),   # attention matrix
        ],
        compiler_params=pltpu.CompilerParams(
            dimension_semantics=("parallel",)),
    )(X, W_A_bf, W_O_bf, E_y_pad, ln_w2, ln_b2)

    return logits_pad[:, :, :Y], attn


def _reference_forward(M_s, E_v, E_y, W_A, W_O, ln_w, ln_b):
    """Pure-JAX f32 reference mirroring the PyTorch module (eval mode)."""
    X = jnp.take(E_v, M_s, axis=0).astype(jnp.float32)
    Q = X
    A = jnp.einsum('bnd,de->bne', Q, W_A)
    A = jnp.einsum('bne,bme->bnm', A, X)
    A = jax.nn.softmax(A, axis=-1)
    Q_c = jnp.einsum('bnm,bmd->bnd', A, X)
    Q_c = jnp.einsum('bnd,de->bne', Q_c, W_O)
    H = Q_c + Q
    mean = jnp.mean(H, axis=-1, keepdims=True)
    var = jnp.mean((H - mean) ** 2, axis=-1, keepdims=True)
    H = (H - mean) * jax.lax.rsqrt(var + 1e-5) * ln_w + ln_b
    logits = jnp.einsum('bnd,yd->bny', H, E_y)
    return logits, A


def _kaiming_uniform(key, shape, fan_in):
    # torch.nn.init.kaiming_uniform_(a=sqrt(5)) bound: sqrt(6 / ((1+a^2) * fan_in))
    gain = math.sqrt(2.0 / (1.0 + 5.0))
    bound = gain * math.sqrt(3.0 / fan_in)
    return jax.random.uniform(key, shape, jnp.float32, -bound, bound)


def make_params(key, V, Y, D):
    k1, k2, k3, k4 = jax.random.split(key, 4)
    # Embedding tables: kaiming-uniform, padding row 0 zeroed.
    E_v = _kaiming_uniform(k1, (V, D), fan_in=D).at[0].set(0.0)
    E_y = _kaiming_uniform(k2, (Y, D), fan_in=D).at[0].set(0.0)
    W_A = _kaiming_uniform(k3, (D, D), fan_in=D)
    W_O = _kaiming_uniform(k4, (D, D), fan_in=D)
    ln_w = jnp.ones((D,), jnp.float32)
    ln_b = jnp.zeros((D,), jnp.float32)
    return E_v, E_y, W_A, W_O, ln_w, ln_b


if __name__ == "__main__":
    # Small, forward-consistent shapes.
    B, N, D = 2, 8, 128     # batch, sequence length, hidden size
    V, Y = 32, 16           # vocab size, number of senses

    key = jax.random.PRNGKey(0)
    k_params, k_tokens = jax.random.split(key)

    E_v, E_y, W_A, W_O, ln_w, ln_b = make_params(k_params, V, Y, D)
    # Token ids in [1, V) (no padding tokens; use_padding=False anyway).
    M_s = jax.random.randint(k_tokens, (B, N), 1, V, dtype=jnp.int32)

    y_logits, A = wsd_forward(M_s, E_v, E_y, W_A, W_O, ln_w, ln_b)
    jax.block_until_ready((y_logits, A))

    assert y_logits.shape == (B, N, Y)
    assert A.shape == (B, N, N)

    # Loose numerical check vs f32 reference (kernel uses bf16 MXU operands).
    ref_logits, ref_A = _reference_forward(M_s, E_v, E_y, W_A, W_O, ln_w, ln_b)
    assert jnp.allclose(A, ref_A, atol=5e-2), "attention mismatch"
    assert jnp.allclose(y_logits, ref_logits, atol=5e-2), "logits mismatch"

    print("KERNEL_OK")
</pallas_src>

<mosaic_0001>
module attributes {stable_mosaic.version = 11 : i64} {
  func.func @_wsd_kernel(%arg0: i32, %arg1: memref<2x8x128xf32, #tpu.memory_space<vmem>>, %arg2: memref<128x128xbf16, #tpu.memory_space<vmem>>, %arg3: memref<128x128xbf16, #tpu.memory_space<vmem>>, %arg4: memref<128x128xbf16, #tpu.memory_space<vmem>>, %arg5: memref<1x128xf32, #tpu.memory_space<vmem>>, %arg6: memref<1x128xf32, #tpu.memory_space<vmem>>, %arg7: memref<2x8x128xf32, #tpu.memory_space<vmem>>, %arg8: memref<2x8x8xf32, #tpu.memory_space<vmem>>) attributes {dimension_semantics = [#tpu.dimension_semantics<parallel>], iteration_bounds = array<i64: 1>, scalar_prefetch = 0 : i64, scratch_operands = 0 : i64, tpu.core_type = #tpu.core_type<tc>, window_params = [{transform_indices = @transform_0, window_bounds = array<i64: 2, 8, 128>}, {pipeline_mode = #tpu.pipeline_mode<synchronous>, transform_indices = @transform_1, window_bounds = array<i64: 128, 128>}, {pipeline_mode = #tpu.pipeline_mode<synchronous>, transform_indices = @transform_2, window_bounds = array<i64: 128, 128>}, {pipeline_mode = #tpu.pipeline_mode<synchronous>, transform_indices = @transform_3, window_bounds = array<i64: 128, 128>}, {pipeline_mode = #tpu.pipeline_mode<synchronous>, transform_indices = @transform_4, window_bounds = array<i64: 1, 128>}, {pipeline_mode = #tpu.pipeline_mode<synchronous>, transform_indices = @transform_5, window_bounds = array<i64: 1, 128>}, {transform_indices = @transform_6, window_bounds = array<i64: 2, 8, 128>}, {transform_indices = @transform_7, window_bounds = array<i64: 2, 8, 8>}]} {
    %c0 = arith.constant 0 : index
    %c0_0 = arith.constant 0 : index
    %c0_1 = arith.constant 0 : index
    %0 = vector.load %arg1[%c0, %c0_0, %c0_1] : memref<2x8x128xf32, #tpu.memory_space<vmem>>, vector<2x8x128xf32>
    %c0_2 = arith.constant 0 : index
    %c0_3 = arith.constant 0 : index
    %1 = vector.load %arg2[%c0_2, %c0_3] : memref<128x128xbf16, #tpu.memory_space<vmem>>, vector<128x128xbf16>
    %c0_4 = arith.constant 0 : index
    %c0_5 = arith.constant 0 : index
    %2 = vector.load %arg3[%c0_4, %c0_5] : memref<128x128xbf16, #tpu.memory_space<vmem>>, vector<128x128xbf16>
    %c0_6 = arith.constant 0 : index
    %c0_7 = arith.constant 0 : index
    %3 = vector.load %arg4[%c0_6, %c0_7] : memref<128x128xbf16, #tpu.memory_space<vmem>>, vector<128x128xbf16>
    %c0_8 = arith.constant 0 : index
    %c0_9 = arith.constant 0 : index
    %4 = vector.load %arg5[%c0_8, %c0_9] : memref<1x128xf32, #tpu.memory_space<vmem>>, vector<1x128xf32>
    %c0_10 = arith.constant 0 : index
    %c0_11 = arith.constant 0 : index
    %5 = vector.load %arg6[%c0_10, %c0_11] : memref<1x128xf32, #tpu.memory_space<vmem>>, vector<1x128xf32>
    %6 = arith.truncf %0 : vector<2x8x128xf32> to vector<2x8x128xbf16>
    %7 = vector.shape_cast %6 : vector<2x8x128xbf16> to vector<16x128xbf16>
    %cst = arith.constant dense<0.000000e+00> : vector<16x128xf32>
    %8 = tpu.matmul %7, %1, %cst {dimension_numbers = #tpu.dot_dimension_numbers<[1], [0], [0], [1], [0, 0, 1, 1], [], []>} : vector<16x128xbf16>, vector<128x128xbf16>, vector<16x128xf32> -> vector<16x128xf32>
    %9 = vector.shape_cast %8 : vector<16x128xf32> to vector<2x8x128xf32>
    %10 = arith.truncf %9 : vector<2x8x128xf32> to vector<2x8x128xbf16>
    "tpu.trace_start"() <{level = 10 : i32, message = "bqd,bkd->bqk"}> : () -> ()
    %cst_12 = arith.constant dense<0.000000e+00> : vector<2x8x8xf32>
    %11 = tpu.matmul %10, %6, %cst_12 {dimension_numbers = #tpu.dot_dimension_numbers<[2], [2], [1], [1], [0, 0, 0, 1, 1, 1], [0], [0]>} : vector<2x8x128xbf16>, vector<2x8x128xbf16>, vector<2x8x8xf32> -> vector<2x8x8xf32>
    "tpu.trace_stop"() : () -> ()
    %cst_13 = arith.constant dense<0xFF800000> : vector<2x8xf32>
    %12 = vector.multi_reduction <maximumf>, %11, %cst_13 [2] : vector<2x8x8xf32> to vector<2x8xf32>
    %13 = vector.shape_cast %12 : vector<2x8xf32> to vector<2x8x1xf32>
    %14 = vector.broadcast %13 : vector<2x8x1xf32> to vector<2x8x8xf32>
    %15 = arith.subf %11, %14 : vector<2x8x8xf32>
    %16 = math.exp %15 : vector<2x8x8xf32>
    %cst_14 = arith.constant dense<0.000000e+00> : vector<2x8xf32>
    %17 = vector.multi_reduction <add>, %16, %cst_14 [2] : vector<2x8x8xf32> to vector<2x8xf32>
    %18 = vector.shape_cast %17 : vector<2x8xf32> to vector<2x8x1xf32>
    %19 = tpu.reciprocal %18 {approx = true} : vector<2x8x1xf32> -> vector<2x8x1xf32>
    %20 = vector.broadcast %19 : vector<2x8x1xf32> to vector<2x8x8xf32>
    %21 = arith.mulf %16, %20 : vector<2x8x8xf32>
    %22 = arith.truncf %21 : vector<2x8x8xf32> to vector<2x8x8xbf16>
    "tpu.trace_start"() <{level = 10 : i32, message = "bqk,bkd->bqd"}> : () -> ()
    %cst_15 = arith.constant dense<0.000000e+00> : vector<2x8x128xf32>
    %23 = tpu.matmul %22, %6, %cst_15 {dimension_numbers = #tpu.dot_dimension_numbers<[2], [1], [1], [2], [0, 0, 0, 1, 1, 2], [0], [0]>} : vector<2x8x8xbf16>, vector<2x8x128xbf16>, vector<2x8x128xf32> -> vector<2x8x128xf32>
    "tpu.trace_stop"() : () -> ()
    %24 = vector.shape_cast %23 : vector<2x8x128xf32> to vector<16x128xf32>
    %25 = arith.truncf %24 : vector<16x128xf32> to vector<16x128xbf16>
    %cst_16 = arith.constant dense<0.000000e+00> : vector<16x128xf32>
    %26 = tpu.matmul %25, %2, %cst_16 {dimension_numbers = #tpu.dot_dimension_numbers<[1], [0], [0], [1], [0, 0, 1, 1], [], []>} : vector<16x128xbf16>, vector<128x128xbf16>, vector<16x128xf32> -> vector<16x128xf32>
    %27 = vector.shape_cast %0 : vector<2x8x128xf32> to vector<16x128xf32>
    %28 = arith.addf %26, %27 : vector<16x128xf32>
    %cst_17 = arith.constant dense<0.000000e+00> : vector<16xf32>
    %29 = vector.multi_reduction <add>, %28, %cst_17 [1] : vector<16x128xf32> to vector<16xf32>
    %30 = vector.shape_cast %29 : vector<16xf32> to vector<16x1xf32>
    %cst_18 = arith.constant 1.280000e+02 : f32
    %31 = vector.broadcast %cst_18 : f32 to vector<16x1xf32>
    %32 = arith.divf %30, %31 : vector<16x1xf32>
    %33 = vector.broadcast %32 : vector<16x1xf32> to vector<16x128xf32>
    %34 = arith.subf %28, %33 : vector<16x128xf32>
    %35 = arith.mulf %34, %34 : vector<16x128xf32>
    %cst_19 = arith.constant dense<0.000000e+00> : vector<16xf32>
    %36 = vector.multi_reduction <add>, %35, %cst_19 [1] : vector<16x128xf32> to vector<16xf32>
    %37 = vector.shape_cast %36 : vector<16xf32> to vector<16x1xf32>
    %cst_20 = arith.constant 1.280000e+02 : f32
    %38 = vector.broadcast %cst_20 : f32 to vector<16x1xf32>
    %39 = arith.divf %37, %38 : vector<16x1xf32>
    %40 = vector.broadcast %32 : vector<16x1xf32> to vector<16x128xf32>
    %41 = arith.subf %28, %40 : vector<16x128xf32>
    %cst_21 = arith.constant 9.99999974E-6 : f32
    %42 = vector.broadcast %cst_21 : f32 to vector<16x1xf32>
    %43 = arith.addf %39, %42 : vector<16x1xf32>
    %44 = math.rsqrt %43 : vector<16x1xf32>
    %45 = vector.broadcast %44 : vector<16x1xf32> to vector<16x128xf32>
    %46 = arith.mulf %41, %45 : vector<16x128xf32>
    %47 = vector.broadcast %4 : vector<1x128xf32> to vector<16x128xf32>
    %48 = arith.mulf %46, %47 : vector<16x128xf32>
    %49 = vector.broadcast %5 : vector<1x128xf32> to vector<16x128xf32>
    %50 = arith.addf %48, %49 : vector<16x128xf32>
    %51 = arith.truncf %50 : vector<16x128xf32> to vector<16x128xbf16>
    %cst_22 = arith.constant dense<0.000000e+00> : vector<16x128xf32>
    %52 = tpu.matmul %51, %3, %cst_22 {dimension_numbers = #tpu.dot_dimension_numbers<[1], [1], [0], [0], [0, 0, 1, 0], [], []>} : vector<16x128xbf16>, vector<128x128xbf16>, vector<16x128xf32> -> vector<16x128xf32>
    %53 = vector.shape_cast %52 : vector<16x128xf32> to vector<2x8x128xf32>
    %c0_23 = arith.constant 0 : index
    %c0_24 = arith.constant 0 : index
    %c0_25 = arith.constant 0 : index
    %54 = vector.load %arg7[%c0_23, %c0_24, %c0_25] : memref<2x8x128xf32, #tpu.memory_space<vmem>>, vector<2x8x128xf32>
    tpu.vector_store %arg7[%c0_23, %c0_24, %c0_25], %53 {strides = array<i32>} : memref<2x8x128xf32, #tpu.memory_space<vmem>>, vector<2x8x128xf32>,
    %c0_26 = arith.constant 0 : index
    %c0_27 = arith.constant 0 : index
    %c0_28 = arith.constant 0 : index
    %55 = vector.load %arg8[%c0_26, %c0_27, %c0_28] : memref<2x8x8xf32, #tpu.memory_space<vmem>>, vector<2x8x8xf32>
    tpu.vector_store %arg8[%c0_26, %c0_27, %c0_28], %21 {strides = array<i32>} : memref<2x8x8xf32, #tpu.memory_space<vmem>>, vector<2x8x8xf32>,
    return
  }
  func.func @transform_0(%arg0: i32) -> (i32, i32, i32) {
    %c0_i32 = arith.constant 0 : i32
    %c0_i32_0 = arith.constant 0 : i32
    %c0_i32_1 = arith.constant 0 : i32
    return %arg0, %c0_i32, %c0_i32_0 : i32, i32, i32
  }
  func.func @transform_1(%arg0: i32) -> (i32, i32) {
    %c0_i32 = arith.constant 0 : i32
    %c0_i32_0 = arith.constant 0 : i32
    %c0_i32_1 = arith.constant 0 : i32
    return %c0_i32, %c0_i32_0 : i32, i32
  }
  func.func @transform_2(%arg0: i32) -> (i32, i32) {
    %c0_i32 = arith.constant 0 : i32
    %c0_i32_0 = arith.constant 0 : i32
    %c0_i32_1 = arith.constant 0 : i32
    return %c0_i32, %c0_i32_0 : i32, i32
  }
  func.func @transform_3(%arg0: i32) -> (i32, i32) {
    %c0_i32 = arith.constant 0 : i32
    %c0_i32_0 = arith.constant 0 : i32
    %c0_i32_1 = arith.constant 0 : i32
    return %c0_i32, %c0_i32_0 : i32, i32
  }
  func.func @transform_4(%arg0: i32) -> (i32, i32) {
    %c0_i32 = arith.constant 0 : i32
    %c0_i32_0 = arith.constant 0 : i32
    %c0_i32_1 = arith.constant 0 : i32
    return %c0_i32, %c0_i32_0 : i32, i32
  }
  func.func @transform_5(%arg0: i32) -> (i32, i32) {
    %c0_i32 = arith.constant 0 : i32
    %c0_i32_0 = arith.constant 0 : i32
    %c0_i32_1 = arith.constant 0 : i32
    return %c0_i32, %c0_i32_0 : i32, i32
  }
  func.func @transform_6(%arg0: i32) -> (i32, i32, i32) {
    %c0_i32 = arith.constant 0 : i32
    %c0_i32_0 = arith.constant 0 : i32
    %c0_i32_1 = arith.constant 0 : i32
    return %arg0, %c0_i32, %c0_i32_0 : i32, i32, i32
  }
  func.func @transform_7(%arg0: i32) -> (i32, i32, i32) {
    %c0_i32 = arith.constant 0 : i32
    %c0_i32_0 = arith.constant 0 : i32
    %c0_i32_1 = arith.constant 0 : i32
    return %arg0, %c0_i32, %c0_i32_0 : i32, i32, i32
  }
}

</mosaic_0001>

<llo_original>
// kernel: wsd_forward.1
$region0: #{wsd_forward.1}
  #allocation0 [shape = 'u32[]', space=smem, size = 0x4, offset = 0x4, fixed_abs, tag = 'smem constant byte address 0x4 - core index']
  #allocation1 [shape = 'u32[72,128]{1,0:T(1,128)}', space=vmem, size = 0x9000, scoped, tag = 'internal scratch']
  %s0 = inlined_call_operand.vmem [shape: f32[2,8,128], index: 0, kind: input, shape index: {}]
  %s1 = inlined_call_operand.vmem [shape: bf16[128,128], index: 1, kind: input, shape index: {}]
  %s2 = inlined_call_operand.vmem [shape: bf16[128,128], index: 2, kind: input, shape index: {}]
  %s3 = inlined_call_operand.vmem [shape: bf16[128,128], index: 3, kind: input, shape index: {}]
  %s4 = inlined_call_operand.vmem [shape: f32[1,128], index: 4, kind: input, shape index: {}]
  %s5 = inlined_call_operand.vmem [shape: f32[1,128], index: 5, kind: input, shape index: {}]
  %s6 = inlined_call_operand.hbm [shape: f32[2,8,128], index: 6, kind: output, shape index: {0}]
  %s7 = inlined_call_operand.hbm [shape: f32[2,8,8], index: 7, kind: output, shape index: {1}]
  %8 = xla_tuple %s6, %s7
  %s9 = sld [smem:[#allocation0]]
  $region42: #{wsd_forward.1} parent=0
    _
  %s11 = ssub.s32 1, %s9
  %s12 = scalar_select 0, %s11, %s9
  $region1: #{wsd_forward.1} parent=0
    #allocation2 [shape = 'u8[8192]{0}', space=vmem, size = 0x2000, scoped, tag = 'output window, operand 0, single buffered']
    #allocation3 [shape = 's32[1]{0}', space=sflag, size = 0x4, scoped, tag = 'scoped memory for wsd_forward.1']
    #allocation4 [shape = 'u8[8192]{0}', space=vmem, size = 0x2000, scoped, tag = 'output window, operand 1, single buffered']
    #allocation5 [shape = 's32[1]{0}', space=sflag, size = 0x4, scoped, tag = 'scoped memory for wsd_forward.1']
    %13 = vsyncpa [#allocation3], 0
    %14 = vsyncpa [#allocation5], 0
    // Predicated region
    $region2: #{wsd_forward.1} parent=1 // pred_check
      _
    $region3: #{wsd_forward.1} parent=1 // pred_check_branch
      %16 = sbr.rel (0) target = $region5
    $region4: #{wsd_forward.1} parent=1 // pred_region
      _
    $region5: #{wsd_forward.1} parent=1 // pred_fallthru
      _
    // Predicated region
    $region6: #{wsd_forward.1} parent=1 // pred_check
      _
    $region7: #{wsd_forward.1} parent=1 // pred_check_branch
      %18 = sbr.rel (0) target = $region9
    $region8: #{wsd_forward.1} parent=1 // pred_region
      _
    $region9: #{wsd_forward.1} parent=1 // pred_fallthru
      _
    // Predicated region
    $region10: #{wsd_forward.1} parent=1 // pred_check
      _
    $region11: #{wsd_forward.1} parent=1 // pred_check_branch
      %20 = sbr.rel (0) target = $region13
    $region12: #{wsd_forward.1} parent=1 // pred_region
      _
    $region13: #{wsd_forward.1} parent=1 // pred_fallthru
      _
    // Predicated region
    $region14: #{wsd_forward.1} parent=1 // pred_check
      _
    $region15: #{wsd_forward.1} parent=1 // pred_check_branch
      %22 = sbr.rel (0) target = $region17
    $region16: #{wsd_forward.1} parent=1 // pred_region
      _
    $region17: #{wsd_forward.1} parent=1 // pred_fallthru
      _
    // Predicated region
    $region18: #{wsd_forward.1} parent=1 // pred_check
      _
    $region19: #{wsd_forward.1} parent=1 // pred_check_branch
      %24 = sbr.rel (0) target = $region21
    $region20: #{wsd_forward.1} parent=1 // pred_region
      _
    $region21: #{wsd_forward.1} parent=1 // pred_fallthru
      _
    // Predicated region
    $region22: #{wsd_forward.1} parent=1 // pred_check
      _
    $region23: #{wsd_forward.1} parent=1 // pred_check_branch
      %26 = sbr.rel (0) target = $region25
    $region24: #{wsd_forward.1} parent=1 // pred_region
      _
    $region25: #{wsd_forward.1} parent=1 // pred_fallthru
      _
    %v28 = vld [vmem:[%s0] sm:$0xff]
    %v29 = vld [vmem:[%s0 + $0x8] sm:$0xff]
    %v30 = vld [vmem:[%s1] sm:$0xf]
    %v31 = vld [vmem:[%s1 + $0x4] sm:$0xf]
    %v32 = vld [vmem:[%s1 + $0x8] sm:$0xf]
    %v33 = vld [vmem:[%s1 + $0xc] sm:$0xf]
    %v34 = vld [vmem:[%s1 + $0x10] sm:$0xf]
    %v35 = vld [vmem:[%s1 + $0x14] sm:$0xf]
    %v36 = vld [vmem:[%s1 + $0x18] sm:$0xf]
    %v37 = vld [vmem:[%s1 + $0x1c] sm:$0xf]
    %v38 = vld [vmem:[%s1 + $0x20] sm:$0xf]
    %v39 = vld [vmem:[%s1 + $0x24] sm:$0xf]
    %v40 = vld [vmem:[%s1 + $0x28] sm:$0xf]
    %v41 = vld [vmem:[%s1 + $0x2c] sm:$0xf]
    %v42 = vld [vmem:[%s1 + $0x30] sm:$0xf]
    %v43 = vld [vmem:[%s1 + $0x34] sm:$0xf]
    %v44 = vld [vmem:[%s1 + $0x38] sm:$0xf]
    %v45 = vld [vmem:[%s1 + $0x3c] sm:$0xf]
    %v46 = vld [vmem:[%s2] sm:$0xf]
    %v47 = vld [vmem:[%s2 + $0x4] sm:$0xf]
    %v48 = vld [vmem:[%s2 + $0x8] sm:$0xf]
    %v49 = vld [vmem:[%s2 + $0xc] sm:$0xf]
    %v50 = vld [vmem:[%s2 + $0x10] sm:$0xf]
    %v51 = vld [vmem:[%s2 + $0x14] sm:$0xf]
    %v52 = vld [vmem:[%s2 + $0x18] sm:$0xf]
    %v53 = vld [vmem:[%s2 + $0x1c] sm:$0xf]
    %v54 = vld [vmem:[%s2 + $0x20] sm:$0xf]
    %v55 = vld [vmem:[%s2 + $0x24] sm:$0xf]
    %v56 = vld [vmem:[%s2 + $0x28] sm:$0xf]
    %v57 = vld [vmem:[%s2 + $0x2c] sm:$0xf]
    %v58 = vld [vmem:[%s2 + $0x30] sm:$0xf]
    %v59 = vld [vmem:[%s2 + $0x34] sm:$0xf]
    %v60 = vld [vmem:[%s2 + $0x38] sm:$0xf]
    %v61 = vld [vmem:[%s2 + $0x3c] sm:$0xf]
    %v62 = vld [vmem:[%s3] sm:$0xf]
    %v63 = vld [vmem:[%s3 + $0x4] sm:$0xf]
    %v64 = vld [vmem:[%s3 + $0x8] sm:$0xf]
    %v65 = vld [vmem:[%s3 + $0xc] sm:$0xf]
    %v66 = vld [vmem:[%s3 + $0x10] sm:$0xf]
    %v67 = vld [vmem:[%s3 + $0x14] sm:$0xf]
    %v68 = vld [vmem:[%s3 + $0x18] sm:$0xf]
    %v69 = vld [vmem:[%s3 + $0x1c] sm:$0xf]
    %v70 = vld [vmem:[%s3 + $0x20] sm:$0xf]
    %v71 = vld [vmem:[%s3 + $0x24] sm:$0xf]
    %v72 = vld [vmem:[%s3 + $0x28] sm:$0xf]
    %v73 = vld [vmem:[%s3 + $0x2c] sm:$0xf]
    %v74 = vld [vmem:[%s3 + $0x30] sm:$0xf]
    %v75 = vld [vmem:[%s3 + $0x34] sm:$0xf]
    %v76 = vld [vmem:[%s3 + $0x38] sm:$0xf]
    %v77 = vld [vmem:[%s3 + $0x3c] sm:$0xf]
    %v78 = vld [vmem:[%s4] sm:$0x1]
    %v79 = vld [vmem:[%s5] sm:$0x1]
    %v80 = vpack.c.bf16 %v28, %v28
    %v81 = vpack.c.bf16 %v29, %v29
    %v84 = vunpack.c.l.b16 %v80
    %v85 = vunpack.c.l.b16 %v81
    %v86 = vpack.c.b16 %v85, %v84
    %v104 = vunpack.c.l.b16 %v30
    %v105 = vunpack.c.l.b16 %v31
    %v106 = vunpack.c.l.b16 %v32
    %v107 = vunpack.c.l.b16 %v33
    %v108 = vunpack.c.l.b16 %v34
    %v109 = vunpack.c.l.b16 %v35
    %v110 = vunpack.c.l.b16 %v36
    %v111 = vunpack.c.l.b16 %v37
    %v112 = vunpack.c.l.b16 %v38
    %v113 = vunpack.c.l.b16 %v39
    %v114 = vunpack.c.l.b16 %v40
    %v115 = vunpack.c.l.b16 %v41
    %v116 = vunpack.c.l.b16 %v42
    %v117 = vunpack.c.l.b16 %v43
    %v118 = vunpack.c.l.b16 %v44
    %v119 = vunpack.c.l.b16 %v45
    %v120 = vpack.c.b16 %v105, %v104
    %v121 = vpack.c.b16 %v107, %v106
    %v122 = vpack.c.b16 %v109, %v108
    %v123 = vpack.c.b16 %v111, %v110
    %v124 = vpack.c.b16 %v113, %v112
    %v125 = vpack.c.b16 %v115, %v114
    %v126 = vpack.c.b16 %v117, %v116
    %v127 = vpack.c.b16 %v119, %v118
    %136 = vmatpush.bf16.msra.mxu0 %v127
    %137 = vmatpush.bf16.msra.mxu0 %v126
    %138 = vmatpush.bf16.msra.mxu0 %v125
    %139 = vmatpush.bf16.msra.mxu0 %v124
    %140 = vmatpush.bf16.msra.mxu0 %v123
    %141 = vmatpush.bf16.msra.mxu0 %v122
    %142 = vmatpush.bf16.msra.mxu0 %v121
    %143 = vmatpush.bf16.msra.mxu0 %v120
    %144 = vmatmul.bf16.gmra.mxu0 %v86
    %v145 = vpop.f32.mrf.mxu0
    %v146 = vadd.f32 0.0, %v145
    %v147 = vpop.f32.mrf.mxu0
    %v148 = vadd.f32 0.0, %v147
    %149 = vdwg.mxu0
    %v150 = vpack.c.bf16 %v146, %v146
    %v151 = vpack.c.bf16 %v148, %v148
    %152 = vmatpush.bf16.xpose.msra.mxu0 0
    %153 = vmatpush.bf16.xpose.msra.mxu0 0
    %154 = vmatpush.bf16.xpose.msra.mxu0 0
    %155 = vmatpush.bf16.xpose.msra.mxu0 0
    %156 = vmatpush.bf16.xpose.msra.mxu0 0
    %157 = vmatpush.bf16.xpose.msra.mxu0 0
    %158 = vmatpush.bf16.xpose.msra.mxu0 0
    %159 = vmatpush.bf16.xpose.msra.mxu0 %v80
    %160 = vmatmul.bf16.gmra.mxu0 %v150
    %v161 = vpop.f32.mrf.mxu0
    %v162 = vadd.f32 0.0, %v161
    %v163 = vpop.f32.mrf.mxu0
    %164 = vdwg.mxu0
    %165 = vmatpush.bf16.xpose.msra.mxu0 0
    %166 = vmatpush.bf16.xpose.msra.mxu0 0
    %167 = vmatpush.bf16.xpose.msra.mxu0 0
    %168 = vmatpush.bf16.xpose.msra.mxu0 0
    %169 = vmatpush.bf16.xpose.msra.mxu0 0
    %170 = vmatpush.bf16.xpose.msra.mxu0 0
    %171 = vmatpush.bf16.xpose.msra.mxu0 0
    %172 = vmatpush.bf16.xpose.msra.mxu0 %v81
    %173 = vmatmul.bf16.gmra.mxu0 %v151
    %v174 = vpop.f32.mrf.mxu0
    %v175 = vadd.f32 0.0, %v174
    %v176 = vpop.f32.mrf.mxu0
    %177 = vdwg.mxu0
    %vm178 = vcmask 64512
    %v179 = vsel %vm178, %v162, -inf
    %180 = vmax.xlane.f32.xlu0 %v179
    %v181 = vpop.xlane.xlu0 %180
    %v182 = vsel %vm178, %v175, -inf
    %183 = vmax.xlane.f32.xlu0 %v182
    %v184 = vpop.xlane.xlu0 %183
    %v185 = vsub.f32 %v162, %v181
    %v186 = vsub.f32 %v175, %v184
    %v187 = vmul.f32 %v185, 1.442695
    %v188 = vpow.pop %v187
    %v189 = vmul.f32 %v186, 1.442695
    %v190 = vpow.pop %v189
    %v191 = vsel %vm178, %v188, 0.0
    %192 = vadd.xlane.f32.xlu0 %v191
    %v193 = vpop.xlane.xlu0 %192
    %v194 = vsel %vm178, %v190, 0.0
    %195 = vadd.xlane.f32.xlu0 %v194
    %v196 = vpop.xlane.xlu0 %195
    %v197 = vrcp.pop %v193
    %v198 = vrcp.pop %v196
    %v199 = vmul.f32 %v188, %v197
    %v200 = vmul.f32 %v190, %v198
    %v201 = vpack.c.bf16 %v199, %v199
    %v202 = vpack.c.bf16 %v200, %v200
    %v204 = vsel %vm178, %v201, 0
    %vm206 = vcmask 1043456
    %v208 = vsel %vm206, %v80, 0
    %210 = vmatpush.bf16.msra.mxu0 0
    %211 = vmatpush.bf16.msra.mxu0 0
    %212 = vmatpush.bf16.msra.mxu0 0
    %213 = vmatpush.bf16.msra.mxu0 0
    %214 = vmatpush.bf16.msra.mxu0 0
    %215 = vmatpush.bf16.msra.mxu0 0
    %216 = vmatpush.bf16.msra.mxu0 0
    %217 = vmatpush.bf16.msra.mxu0 %v208
    %218 = vmatmul.bf16.gmra.mxu0 %v204
    %v219 = vpop.f32.mrf.mxu0
    %v220 = vadd.f32 0.0, %v219
    %v221 = vpop.f32.mrf.mxu0
    %222 = vdwg.mxu0
    %v224 = vsel %vm178, %v202, 0
    %v227 = vsel %vm206, %v81, 0
    %229 = vmatpush.bf16.msra.mxu0 0
    %230 = vmatpush.bf16.msra.mxu0 0
    %231 = vmatpush.bf16.msra.mxu0 0
    %232 = vmatpush.bf16.msra.mxu0 0
    %233 = vmatpush.bf16.msra.mxu0 0
    %234 = vmatpush.bf16.msra.mxu0 0
    %235 = vmatpush.bf16.msra.mxu0 0
    %236 = vmatpush.bf16.msra.mxu0 %v227
    %237 = vmatmul.bf16.gmra.mxu0 %v224
    %v238 = vpop.f32.mrf.mxu0
    %v239 = vadd.f32 0.0, %v238
    %v240 = vpop.f32.mrf.mxu0
    %241 = vdwg.mxu0
    %v242 = vpack.c.bf16 %v239, %v220
    %v259 = vunpack.c.l.b16 %v46
    %v260 = vunpack.c.l.b16 %v47
    %v261 = vunpack.c.l.b16 %v48
    %v262 = vunpack.c.l.b16 %v49
    %v263 = vunpack.c.l.b16 %v50
    %v264 = vunpack.c.l.b16 %v51
    %v265 = vunpack.c.l.b16 %v52
    %v266 = vunpack.c.l.b16 %v53
    %v267 = vunpack.c.l.b16 %v54
    %v268 = vunpack.c.l.b16 %v55
    %v269 = vunpack.c.l.b16 %v56
    %v270 = vunpack.c.l.b16 %v57
    %v271 = vunpack.c.l.b16 %v58
    %v272 = vunpack.c.l.b16 %v59
    %v273 = vunpack.c.l.b16 %v60
    %v274 = vunpack.c.l.b16 %v61
    %v275 = vpack.c.b16 %v260, %v259
    %v276 = vpack.c.b16 %v262, %v261
    %v277 = vpack.c.b16 %v264, %v263
    %v278 = vpack.c.b16 %v266, %v265
    %v279 = vpack.c.b16 %v268, %v267
    %v280 = vpack.c.b16 %v270, %v269
    %v281 = vpack.c.b16 %v272, %v271
    %v282 = vpack.c.b16 %v274, %v273
    %291 = vmatpush.bf16.msra.mxu0 %v282
    %292 = vmatpush.bf16.msra.mxu0 %v281
    %293 = vmatpush.bf16.msra.mxu0 %v280
    %294 = vmatpush.bf16.msra.mxu0 %v279
    %295 = vmatpush.bf16.msra.mxu0 %v278
    %296 = vmatpush.bf16.msra.mxu0 %v277
    %297 = vmatpush.bf16.msra.mxu0 %v276
    %298 = vmatpush.bf16.msra.mxu0 %v275
    %299 = vmatmul.bf16.gmra.mxu0 %v242
    %v300 = vpop.f32.mrf.mxu0
    %v301 = vadd.f32 %v28, %v300
    %v302 = vpop.f32.mrf.mxu0
    %v303 = vadd.f32 %v29, %v302
    %304 = vdwg.mxu0
    %305 = vadd.xlane.f32.xlu0 %v301
    %v306 = vpop.xlane.xlu0 %305
    %307 = vadd.xlane.f32.xlu0 %v303
    %v308 = vpop.xlane.xlu0 %307
    %v309 = vrcp.pop 128.0
    %v310 = vmul.f32 128.0, %v309
    %v311 = vsub.f32 1.0, %v310
    %v312 = vmul.f32 %v309, %v311
    %v313 = vadd.f32 %v309, %v312
    %vm314 = vweird.f32 %v309
    %v315 = vsel %vm314, %v309, %v313
    %v316 = vmul.f32 %v306, %v315
    %v317 = vmul.f32 %v308, %v315
    %v318 = vsub.f32 %v301, %v316
    %v319 = vsub.f32 %v303, %v317
    %v320 = vmul.f32 %v318, %v318
    %v321 = vmul.f32 %v319, %v319
    %322 = vadd.xlane.f32.xlu0 %v320
    %v323 = vpop.xlane.xlu0 %322
    %324 = vadd.xlane.f32.xlu0 %v321
    %v325 = vpop.xlane.xlu0 %324
    %v326 = vmul.f32 %v323, %v315
    %v327 = vmul.f32 %v325, %v315
    %v328 = vadd.f32 %v326, 1e-05
    %v329 = vadd.f32 %v327, 1e-05
    %v330 = vrsqrt.pop %v328
    %v331 = vmul.f32 %v330, %v328
    %v332 = vmul.f32 %v331, %v330
    %v333 = vmul.f32 0.5, %v332
    %v334 = vsub.f32 1.5, %v333
    %v335 = vmul.f32 %v330, %v334
    %vm336 = vweird.f32 %v328
    %vm337 = vweird.f32 %v330
    %vm338 = vmor %vm336, %vm337
    %v339 = vsel %vm338, %v330, %v335
    %v340 = vrsqrt.pop %v329
    %v341 = vmul.f32 %v340, %v329
    %v342 = vmul.f32 %v341, %v340
    %v343 = vmul.f32 0.5, %v342
    %v344 = vsub.f32 1.5, %v343
    %v345 = vmul.f32 %v340, %v344
    %vm346 = vweird.f32 %v329
    %vm347 = vweird.f32 %v340
    %vm348 = vmor %vm346, %vm347
    %v349 = vsel %vm348, %v340, %v345
    %v350 = vmul.f32 %v318, %v339
    %v351 = vmul.f32 %v319, %v349
    %v353 = vperm.slane %v78, 0
    %v355 = vmul.f32 %v350, %v353
    %v356 = vmul.f32 %v351, %v353
    %v358 = vperm.slane %v79, 0
    %v360 = vadd.f32 %v355, %v358
    %v361 = vadd.f32 %v356, %v358
    %v362 = vpack.c.bf16 %v361, %v360
    %v379 = vunpack.c.l.b16 %v62
    %v380 = vunpack.c.l.b16 %v63
    %v381 = vunpack.c.l.b16 %v64
    %v382 = vunpack.c.l.b16 %v65
    %v383 = vunpack.c.l.b16 %v66
    %v384 = vunpack.c.l.b16 %v67
    %v385 = vunpack.c.l.b16 %v68
    %v386 = vunpack.c.l.b16 %v69
    %v387 = vunpack.c.l.b16 %v70
    %v388 = vunpack.c.l.b16 %v71
    %v389 = vunpack.c.l.b16 %v72
    %v390 = vunpack.c.l.b16 %v73
    %v391 = vunpack.c.l.b16 %v74
    %v392 = vunpack.c.l.b16 %v75
    %v393 = vunpack.c.l.b16 %v76
    %v394 = vunpack.c.l.b16 %v77
    %v395 = vpack.c.b16 %v380, %v379
    %v396 = vpack.c.b16 %v382, %v381
    %v397 = vpack.c.b16 %v384, %v383
    %v398 = vpack.c.b16 %v386, %v385
    %v399 = vpack.c.b16 %v388, %v387
    %v400 = vpack.c.b16 %v390, %v389
    %v401 = vpack.c.b16 %v392, %v391
    %v402 = vpack.c.b16 %v394, %v393
    %411 = vmatpush.bf16.xpose.msra.mxu0 %v402
    %412 = vmatpush.bf16.xpose.msra.mxu0 %v401
    %413 = vmatpush.bf16.xpose.msra.mxu0 %v400
    %414 = vmatpush.bf16.xpose.msra.mxu0 %v399
    %415 = vmatpush.bf16.xpose.msra.mxu0 %v398
    %416 = vmatpush.bf16.xpose.msra.mxu0 %v397
    %417 = vmatpush.bf16.xpose.msra.mxu0 %v396
    %418 = vmatpush.bf16.xpose.msra.mxu0 %v395
    %419 = vmatmul.bf16.gmra.mxu0 %v362
    %v420 = vpop.f32.mrf.mxu0
    %v421 = vadd.f32 0.0, %v420
    %v422 = vpop.f32.mrf.mxu0
    %v423 = vadd.f32 0.0, %v422
    %424 = vdwg.mxu0
    %425 = vst [vmem:[#allocation2] sm:$0xff] %v421
    %426 = vst [vmem:[#allocation2 + $0x8] sm:$0xff] %v423
    %427 = vst.msk [vmem:[#allocation4] sm:$0xff] %vm178, %v199
    %428 = vst.msk [vmem:[#allocation4 + $0x8] sm:$0xff] %vm178, %v200
    // Predicated region
    $region26: #{wsd_forward.1} parent=1 // pred_check
      _
    $region27: #{wsd_forward.1} parent=1 // pred_check_branch
      %430 = sbr.rel (0) target = $region29
    $region28: #{wsd_forward.1} parent=1 // pred_region
      %432 = vsyncadd [#allocation3], 0
      %s433 = sshll.u32 [#allocation2], 4
      %s434 = int_to_ptr.vmem [resolvable:$true] %s433
      %s435 = sshll.u32 %s6, 4
      %s436 = int_to_ptr.hbm [resolvable:$true] %s435
      %441 = dma.vmem_to_hbm [thread:$0]  %s434, 256, %s436, [#allocation3], 128, 128, 8
    $region29: #{wsd_forward.1} parent=1 // pred_fallthru
      _
    // Predicated region
    $region30: #{wsd_forward.1} parent=1 // pred_check
      _
    $region31: #{wsd_forward.1} parent=1 // pred_check_branch
      %443 = sbr.rel (0) target = $region33
    $region32: #{wsd_forward.1} parent=1 // pred_region
      %445 = vsyncadd [#allocation5], 0
      %s446 = sshll.u32 [#allocation4], 4
      %s447 = int_to_ptr.vmem [resolvable:$true] %s446
      %s448 = sshll.u32 %s7, 4
      %s449 = int_to_ptr.hbm [resolvable:$true] %s448
      %454 = dma.vmem_to_hbm [thread:$0]  %s447, 256, %s449, [#allocation5], 128, 128, 8
    $region33: #{wsd_forward.1} parent=1 // pred_fallthru
      _
    // Predicated region
    $region34: #{wsd_forward.1} parent=1 // pred_check
      _
    $region35: #{wsd_forward.1} parent=1 // pred_check_branch
      %456 = sbr.rel (0) target = $region37
    $region36: #{wsd_forward.1} parent=1 // pred_region
      %458 = dma.done [#allocation3], 256
    $region37: #{wsd_forward.1} parent=1 // pred_fallthru
      _
    // Predicated region
    $region38: #{wsd_forward.1} parent=1 // pred_check
      _
    $region39: #{wsd_forward.1} parent=1 // pred_check_branch
      %460 = sbr.rel (0) target = $region41
    $region40: #{wsd_forward.1} parent=1 // pred_region
      %462 = dma.done [#allocation5], 256
    $region41: #{wsd_forward.1} parent=1 // pred_fallthru
      _
    %463 = vsyncpa [#allocation3], 1
    %464 = vsyncpa [#allocation5], 1

</llo_original>
